<compile_context>
chip_gen: v6e
topology: v6e:2x2x1
jax: 0.10.0
libtpu: 0.0.40
codegen_flags: <defaults>
</compile_context>

<pallas_src>
import math
import functools

import jax
import jax.numpy as jnp
from jax.experimental import pallas as pl
from jax.experimental.pallas import tpu as pltpu


# --------------------------------------------------------------------------
# Kernel 1: fused QKV projection, head-major output [B, nh, S, hd]
# --------------------------------------------------------------------------
def _qkv_proj_kernel(x_ref, wqkv_ref, bqkv_ref, q_ref, k_ref, v_ref,
                     *, nh, hd, H):
    x = x_ref[0]                                              # [TS, H]
    qkv = jnp.dot(x, wqkv_ref[...],
                  preferred_element_type=jnp.float32) + bqkv_ref[...]
    qkv = qkv.astype(q_ref.dtype)                             # [TS, 3H]
    # Split into heads and write head-major (static slices, no transpose op).
    for h in range(nh):
        q_ref[0, h] = qkv[:, h * hd:(h + 1) * hd]
        k_ref[0, h] = qkv[:, H + h * hd:H + (h + 1) * hd]
        v_ref[0, h] = qkv[:, 2 * H + h * hd:2 * H + (h + 1) * hd]


# --------------------------------------------------------------------------
# Kernel 2: banded flash attention + fused output projection
# --------------------------------------------------------------------------
def _attn_kernel(q_ref, k_ref, v_ref, wo_ref, bo_ref, o_ref,
                 m_sc, l_sc, acc_sc,
                 *, nh, hd, TQ, TK, hw, num_global, scale):
    qi = pl.program_id(1)
    ki = pl.program_id(2)

    @pl.when(ki == 0)
    def _():
        m_sc[...] = jnp.full(m_sc.shape, -jnp.inf, dtype=jnp.float32)
        l_sc[...] = jnp.zeros(l_sc.shape, dtype=jnp.float32)
        acc_sc[...] = jnp.zeros(acc_sc.shape, dtype=jnp.float32)

    q0 = qi * TQ
    k0 = ki * TK
    # A (q_tile, k_tile) block contributes iff it touches the sliding-window
    # band, the global-key prefix, or the q tile contains global query rows.
    band = jnp.logical_and(k0 <= q0 + TQ - 1 + hw, k0 + TK - 1 >= q0 - hw)
    needed = jnp.logical_or(
        jnp.logical_or(q0 < num_global, k0 < num_global), band)

    @pl.when(needed)
    def _():
        q = q_ref[0]                                          # [nh, TQ, hd]
        k = k_ref[0]                                          # [nh, TK, hd]
        s = jnp.einsum('hqd,hkd->hqk', q, k,
                       preferred_element_type=jnp.float32) * scale

        rows = q0 + jax.lax.broadcasted_iota(jnp.int32, (TQ, TK), 0)
        cols = k0 + jax.lax.broadcasted_iota(jnp.int32, (TQ, TK), 1)
        allow = jnp.logical_or(
            jnp.logical_or(jnp.abs(cols - rows) <= hw, rows < num_global),
            cols < num_global)
        # Additive -10000 bias (matches the PyTorch module exactly).
        s = s + jnp.where(allow, 0.0, -10000.0)[None, :, :]

        m_prev = m_sc[...]
        m_new = jnp.maximum(m_prev, s.max(axis=-1, keepdims=True))
        alpha = jnp.exp(m_prev - m_new)
        p = jnp.exp(s - m_new)
        l_sc[...] = alpha * l_sc[...] + p.sum(axis=-1, keepdims=True)
        acc_sc[...] = alpha * acc_sc[...] + jnp.einsum(
            'hqk,hkd->hqd', p.astype(v_ref.dtype), v_ref[0],
            preferred_element_type=jnp.float32)
        m_sc[...] = m_new

    @pl.when(ki == pl.num_programs(2) - 1)
    def _():
        ctx = acc_sc[...] * pl.reciprocal(l_sc[...], approx=False)  # [nh,TQ,hd]
        # Output projection fused per q-tile: sum_h ctx[h] @ WoT[h] + bo.
        proj = jnp.einsum('hqd,hdo->hqo', ctx.astype(wo_ref.dtype), wo_ref[...],
                          preferred_element_type=jnp.float32)       # [nh,TQ,H]
        out = proj.sum(axis=0) + bo_ref[...]
        o_ref[0] = out.astype(o_ref.dtype)


# --------------------------------------------------------------------------
# Wrapper
# --------------------------------------------------------------------------
def longformer_attention(hidden_states, params, *, num_heads, window_size,
                         global_tokens_ratio, q_tile=128, k_tile=128,
                         seq_tile=128):
    B, S, H = hidden_states.shape
    hd = H // num_heads
    num_global = max(1, int(S * global_tokens_ratio))
    hw = window_size // 2
    dtype = hidden_states.dtype

    wq, bq, wk, bk, wv, bv, wo, bo = params

    # Host-side weight prep: pre-transposed, fused QKV; Wo^T split per head.
    wqkv = jnp.concatenate([wq.T, wk.T, wv.T], axis=1)        # [H, 3H]
    bqkv = jnp.concatenate([bq, bk, bv]).reshape(1, 3 * H)
    wo3 = jnp.transpose(wo).reshape(num_heads, hd, H)         # [nh, hd, H]
    bo2 = bo.reshape(1, H)

    TS = seq_tile if S % seq_tile == 0 else S
    TQ = q_tile if S % q_tile == 0 else S
    TK = k_tile if S % k_tile == 0 else S
    num_k = S // TK

    # ---- kernel 1: fused QKV projection -> head-major q, k, v ----
    qkv_kernel = functools.partial(_qkv_proj_kernel, nh=num_heads, hd=hd, H=H)
    head_shape = jax.ShapeDtypeStruct((B, num_heads, S, hd), dtype)

    def head_out_spec():
        return pl.BlockSpec((1, num_heads, TS, hd), lambda b, si: (b, 0, si, 0))

    q, k, v = pl.pallas_call(
        qkv_kernel,
        out_shape=[head_shape, head_shape, head_shape],
        grid_spec=pltpu.PrefetchScalarGridSpec(
            num_scalar_prefetch=0,
            grid=(B, S // TS),
            in_specs=[
                pl.BlockSpec((1, TS, H), lambda b, si: (b, si, 0)),
                pl.BlockSpec((H, 3 * H), lambda b, si: (0, 0)),
                pl.BlockSpec((1, 3 * H), lambda b, si: (0, 0)),
            ],
            out_specs=[head_out_spec(), head_out_spec(), head_out_spec()],
        ),
        compiler_params=pltpu.CompilerParams(
            dimension_semantics=("parallel", "parallel"),
            vmem_limit_bytes=64 * 1024 * 1024),
    )(hidden_states, wqkv, bqkv)

    # ---- kernel 2: banded flash attention + output projection ----
    prefix_end = max(1, -(-num_global // TK))   # number of global-key tiles

    def kv_index_map(b, qi, ki):
        # Clamp skipped key tiles onto an already-fetched tile so consecutive
        # grid steps keep the same block index (no redundant DMA).  For every
        # "needed" step this reduces to eff == ki.
        q0 = qi * TQ
        band_lo = jnp.maximum(q0 - hw, 0) // TK
        band_hi = jnp.minimum((q0 + TQ - 1 + hw) // TK, num_k - 1)
        eff = jnp.where(ki < prefix_end, ki,
              jnp.where(ki < band_lo, prefix_end - 1,
              jnp.where(ki <= band_hi, ki, band_hi)))
        eff = jnp.where(q0 < num_global, ki, eff)   # global q rows need all keys
        return (b, 0, eff, 0)

    attn_kernel = functools.partial(
        _attn_kernel, nh=num_heads, hd=hd, TQ=TQ, TK=TK,
        hw=hw, num_global=num_global, scale=1.0 / math.sqrt(hd))

    out = pl.pallas_call(
        attn_kernel,
        out_shape=jax.ShapeDtypeStruct((B, S, H), dtype),
        grid_spec=pltpu.PrefetchScalarGridSpec(
            num_scalar_prefetch=0,
            grid=(B, S // TQ, num_k),
            in_specs=[
                pl.BlockSpec((1, num_heads, TQ, hd),
                             lambda b, qi, ki: (b, 0, qi, 0)),
                pl.BlockSpec((1, num_heads, TK, hd), kv_index_map),
                pl.BlockSpec((1, num_heads, TK, hd), kv_index_map),
                pl.BlockSpec((num_heads, hd, H), lambda b, qi, ki: (0, 0, 0)),
                pl.BlockSpec((1, H), lambda b, qi, ki: (0, 0)),
            ],
            out_specs=pl.BlockSpec((1, TQ, H), lambda b, qi, ki: (b, qi, 0)),
            scratch_shapes=[
                pltpu.VMEM((num_heads, TQ, 1), jnp.float32),   # running max
                pltpu.VMEM((num_heads, TQ, 1), jnp.float32),   # running sum
                pltpu.VMEM((num_heads, TQ, hd), jnp.float32),  # accumulator
            ]),
        compiler_params=pltpu.CompilerParams(
            dimension_semantics=("parallel", "parallel", "arbitrary"),
            vmem_limit_bytes=64 * 1024 * 1024),
    )(q, k, v, wo3, bo2)
    return out


# --------------------------------------------------------------------------
# Pure-JAX reference (replicates the PyTorch forward)
# --------------------------------------------------------------------------
def reference(hidden_states, params, *, num_heads, window_size,
              global_tokens_ratio):
    B, S, H = hidden_states.shape
    head_dim = H // num_heads
    wq, bq, wk, bk, wv, bv, wo, bo = params

    def proj(x, w, b):
        return x @ w.T + b

    q = proj(hidden_states, wq, bq).reshape(B, S, num_heads, head_dim).transpose(0, 2, 1, 3)
    k = proj(hidden_states, wk, bk).reshape(B, S, num_heads, head_dim).transpose(0, 2, 1, 3)
    v = proj(hidden_states, wv, bv).reshape(B, S, num_heads, head_dim).transpose(0, 2, 1, 3)

    pos = jnp.arange(S)
    dist = pos[None, :] - pos[:, None]
    window_mask = jnp.abs(dist) <= window_size // 2
    num_global = max(1, int(S * global_tokens_ratio))
    gmask = jnp.logical_or(pos[:, None] < num_global, pos[None, :] < num_global)
    combined = jnp.logical_or(window_mask, gmask)[None, None]

    scores = jnp.einsum('bhqd,bhkd->bhqk', q, k) / math.sqrt(head_dim)
    scores = scores + jnp.where(combined, 0.0, -10000.0)
    probs = jax.nn.softmax(scores, axis=-1)
    ctx = jnp.einsum('bhqk,bhkd->bhqd', probs, v)
    ctx = ctx.transpose(0, 2, 1, 3).reshape(B, S, H)
    return ctx @ wo.T + bo


def init_params(key, hidden_size):
    ks = jax.random.split(key, 8)
    bound = 1.0 / math.sqrt(hidden_size)

    def lin(kw, kb):
        w = jax.random.uniform(kw, (hidden_size, hidden_size), jnp.float32, -bound, bound)
        b = jax.random.uniform(kb, (hidden_size,), jnp.float32, -bound, bound)
        return w, b

    wq, bq = lin(ks[0], ks[1])
    wk, bk = lin(ks[2], ks[3])
    wv, bv = lin(ks[4], ks[5])
    wo, bo = lin(ks[6], ks[7])
    return (wq, bq, wk, bk, wv, bv, wo, bo)


if __name__ == "__main__":
    key = jax.random.PRNGKey(0)

    def run_case(B, S, H, num_heads, window_size, ratio, k):
        kx, kp = jax.random.split(k)
        x = jax.random.normal(kx, (B, S, H), jnp.float32)
        params = init_params(kp, H)
        out = longformer_attention(x, params, num_heads=num_heads,
                                   window_size=window_size,
                                   global_tokens_ratio=ratio)
        out = jax.block_until_ready(out)
        ref = reference(x, params, num_heads=num_heads,
                        window_size=window_size, global_tokens_ratio=ratio)
        assert out.shape == (B, S, H)
        err = jnp.max(jnp.abs(out - ref))
        assert jnp.allclose(out, ref, rtol=1e-4, atol=1e-4), \
            f"max abs err {err} at shape {(B, S, H)}"

    k1, k2 = jax.random.split(key)
    # Small shape consistent with the module (matches original harness).
    run_case(2, 8, 32, 4, 4, 0.1, k1)
    # Modest shape exercising the multi-tile flash path and key-tile skipping.
    run_case(1, 512, 64, 4, 32, 0.02, k2)
    print("KERNEL_OK")
</pallas_src>

<mosaic_0001>
module attributes {stable_mosaic.version = 11 : i64} {
  func.func @_qkv_proj_kernel(%arg0: i32, %arg1: i32, %arg2: memref<1x8x32xf32, #tpu.memory_space<vmem>>, %arg3: memref<32x96xf32, #tpu.memory_space<vmem>>, %arg4: memref<1x96xf32, #tpu.memory_space<vmem>>, %arg5: memref<1x4x8x8xf32, #tpu.memory_space<vmem>>, %arg6: memref<1x4x8x8xf32, #tpu.memory_space<vmem>>, %arg7: memref<1x4x8x8xf32, #tpu.memory_space<vmem>>) attributes {dimension_semantics = [#tpu.dimension_semantics<parallel>, #tpu.dimension_semantics<parallel>], iteration_bounds = array<i64: 2, 1>, scalar_prefetch = 0 : i64, scratch_operands = 0 : i64, tpu.core_type = #tpu.core_type<tc>, window_params = [{transform_indices = @transform_0, window_bounds = array<i64: 1, 8, 32>}, {pipeline_mode = #tpu.pipeline_mode<synchronous>, transform_indices = @transform_1, window_bounds = array<i64: 32, 96>}, {pipeline_mode = #tpu.pipeline_mode<synchronous>, transform_indices = @transform_2, window_bounds = array<i64: 1, 96>}, {transform_indices = @transform_3, window_bounds = array<i64: 1, 4, 8, 8>}, {transform_indices = @transform_4, window_bounds = array<i64: 1, 4, 8, 8>}, {transform_indices = @transform_5, window_bounds = array<i64: 1, 4, 8, 8>}]} {
    %c0 = arith.constant 0 : index
    %c0_0 = arith.constant 0 : index
    %c0_1 = arith.constant 0 : index
    %0 = vector.load %arg2[%c0, %c0_0, %c0_1] : memref<1x8x32xf32, #tpu.memory_space<vmem>>, vector<1x8x32xf32>
    %1 = vector.shape_cast %0 : vector<1x8x32xf32> to vector<8x32xf32>
    %c0_2 = arith.constant 0 : index
    %c0_3 = arith.constant 0 : index
    %2 = vector.load %arg3[%c0_2, %c0_3] : memref<32x96xf32, #tpu.memory_space<vmem>>, vector<32x96xf32>
    %cst = arith.constant dense<0.000000e+00> : vector<8x96xf32>
    %3 = tpu.matmul %1, %2, %cst {dimension_numbers = #tpu.dot_dimension_numbers<[1], [0], [0], [1], [0, 0, 1, 1], [], []>} : vector<8x32xf32>, vector<32x96xf32>, vector<8x96xf32> -> vector<8x96xf32>
    %c0_4 = arith.constant 0 : index
    %c0_5 = arith.constant 0 : index
    %4 = vector.load %arg4[%c0_4, %c0_5] : memref<1x96xf32, #tpu.memory_space<vmem>>, vector<1x96xf32>
    %5 = vector.broadcast %4 : vector<1x96xf32> to vector<8x96xf32>
    %6 = arith.addf %3, %5 : vector<8x96xf32>
    %7 = vector.extract_strided_slice %6 {offsets = [0, 0], sizes = [8, 8], strides = [1, 1]} : vector<8x96xf32> to vector<8x8xf32>
    %c0_6 = arith.constant 0 : index
    %c0_7 = arith.constant 0 : index
    %c0_8 = arith.constant 0 : index
    %c0_9 = arith.constant 0 : index
    %8 = vector.load %arg5[%c0_6, %c0_7, %c0_8, %c0_9] : memref<1x4x8x8xf32, #tpu.memory_space<vmem>>, vector<1x1x8x8xf32>
    %9 = vector.shape_cast %8 : vector<1x1x8x8xf32> to vector<8x8xf32>
    %10 = vector.shape_cast %7 : vector<8x8xf32> to vector<1x1x8x8xf32>
    tpu.vector_store %arg5[%c0_6, %c0_7, %c0_8, %c0_9], %10 {strides = array<i32>} : memref<1x4x8x8xf32, #tpu.memory_space<vmem>>, vector<1x1x8x8xf32>,
    %11 = vector.extract_strided_slice %6 {offsets = [0, 32], sizes = [8, 8], strides = [1, 1]} : vector<8x96xf32> to vector<8x8xf32>
    %c0_10 = arith.constant 0 : index
    %c0_11 = arith.constant 0 : index
    %c0_12 = arith.constant 0 : index
    %c0_13 = arith.constant 0 : index
    %12 = vector.load %arg6[%c0_10, %c0_11, %c0_12, %c0_13] : memref<1x4x8x8xf32, #tpu.memory_space<vmem>>, vector<1x1x8x8xf32>
    %13 = vector.shape_cast %12 : vector<1x1x8x8xf32> to vector<8x8xf32>
    %14 = vector.shape_cast %11 : vector<8x8xf32> to vector<1x1x8x8xf32>
    tpu.vector_store %arg6[%c0_10, %c0_11, %c0_12, %c0_13], %14 {strides = array<i32>} : memref<1x4x8x8xf32, #tpu.memory_space<vmem>>, vector<1x1x8x8xf32>,
    %15 = vector.extract_strided_slice %6 {offsets = [0, 64], sizes = [8, 8], strides = [1, 1]} : vector<8x96xf32> to vector<8x8xf32>
    %c0_14 = arith.constant 0 : index
    %c0_15 = arith.constant 0 : index
    %c0_16 = arith.constant 0 : index
    %c0_17 = arith.constant 0 : index
    %16 = vector.load %arg7[%c0_14, %c0_15, %c0_16, %c0_17] : memref<1x4x8x8xf32, #tpu.memory_space<vmem>>, vector<1x1x8x8xf32>
    %17 = vector.shape_cast %16 : vector<1x1x8x8xf32> to vector<8x8xf32>
    %18 = vector.shape_cast %15 : vector<8x8xf32> to vector<1x1x8x8xf32>
    tpu.vector_store %arg7[%c0_14, %c0_15, %c0_16, %c0_17], %18 {strides = array<i32>} : memref<1x4x8x8xf32, #tpu.memory_space<vmem>>, vector<1x1x8x8xf32>,
    %19 = vector.extract_strided_slice %6 {offsets = [0, 8], sizes = [8, 8], strides = [1, 1]} : vector<8x96xf32> to vector<8x8xf32>
    %c0_18 = arith.constant 0 : index
    %c1 = arith.constant 1 : index
    %c0_19 = arith.constant 0 : index
    %c0_20 = arith.constant 0 : index
    %20 = vector.load %arg5[%c0_18, %c1, %c0_19, %c0_20] : memref<1x4x8x8xf32, #tpu.memory_space<vmem>>, vector<1x1x8x8xf32>
    %21 = vector.shape_cast %20 : vector<1x1x8x8xf32> to vector<8x8xf32>
    %22 = vector.shape_cast %19 : vector<8x8xf32> to vector<1x1x8x8xf32>
    tpu.vector_store %arg5[%c0_18, %c1, %c0_19, %c0_20], %22 {strides = array<i32>} : memref<1x4x8x8xf32, #tpu.memory_space<vmem>>, vector<1x1x8x8xf32>,
    %23 = vector.extract_strided_slice %6 {offsets = [0, 40], sizes = [8, 8], strides = [1, 1]} : vector<8x96xf32> to vector<8x8xf32>
    %c0_21 = arith.constant 0 : index
    %c1_22 = arith.constant 1 : index
    %c0_23 = arith.constant 0 : index
    %c0_24 = arith.constant 0 : index
    %24 = vector.load %arg6[%c0_21, %c1_22, %c0_23, %c0_24] : memref<1x4x8x8xf32, #tpu.memory_space<vmem>>, vector<1x1x8x8xf32>
    %25 = vector.shape_cast %24 : vector<1x1x8x8xf32> to vector<8x8xf32>
    %26 = vector.shape_cast %23 : vector<8x8xf32> to vector<1x1x8x8xf32>
    tpu.vector_store %arg6[%c0_21, %c1_22, %c0_23, %c0_24], %26 {strides = array<i32>} : memref<1x4x8x8xf32, #tpu.memory_space<vmem>>, vector<1x1x8x8xf32>,
    %27 = vector.extract_strided_slice %6 {offsets = [0, 72], sizes = [8, 8], strides = [1, 1]} : vector<8x96xf32> to vector<8x8xf32>
    %c0_25 = arith.constant 0 : index
    %c1_26 = arith.constant 1 : index
    %c0_27 = arith.constant 0 : index
    %c0_28 = arith.constant 0 : index
    %28 = vector.load %arg7[%c0_25, %c1_26, %c0_27, %c0_28] : memref<1x4x8x8xf32, #tpu.memory_space<vmem>>, vector<1x1x8x8xf32>
    %29 = vector.shape_cast %28 : vector<1x1x8x8xf32> to vector<8x8xf32>
    %30 = vector.shape_cast %27 : vector<8x8xf32> to vector<1x1x8x8xf32>
    tpu.vector_store %arg7[%c0_25, %c1_26, %c0_27, %c0_28], %30 {strides = array<i32>} : memref<1x4x8x8xf32, #tpu.memory_space<vmem>>, vector<1x1x8x8xf32>,
    %31 = vector.extract_strided_slice %6 {offsets = [0, 16], sizes = [8, 8], strides = [1, 1]} : vector<8x96xf32> to vector<8x8xf32>
    %c0_29 = arith.constant 0 : index
    %c2 = arith.constant 2 : index
    %c0_30 = arith.constant 0 : index
    %c0_31 = arith.constant 0 : index
    %32 = vector.load %arg5[%c0_29, %c2, %c0_30, %c0_31] : memref<1x4x8x8xf32, #tpu.memory_space<vmem>>, vector<1x1x8x8xf32>
    %33 = vector.shape_cast %32 : vector<1x1x8x8xf32> to vector<8x8xf32>
    %34 = vector.shape_cast %31 : vector<8x8xf32> to vector<1x1x8x8xf32>
    tpu.vector_store %arg5[%c0_29, %c2, %c0_30, %c0_31], %34 {strides = array<i32>} : memref<1x4x8x8xf32, #tpu.memory_space<vmem>>, vector<1x1x8x8xf32>,
    %35 = vector.extract_strided_slice %6 {offsets = [0, 48], sizes = [8, 8], strides = [1, 1]} : vector<8x96xf32> to vector<8x8xf32>
    %c0_32 = arith.constant 0 : index
    %c2_33 = arith.constant 2 : index
    %c0_34 = arith.constant 0 : index
    %c0_35 = arith.constant 0 : index
    %36 = vector.load %arg6[%c0_32, %c2_33, %c0_34, %c0_35] : memref<1x4x8x8xf32, #tpu.memory_space<vmem>>, vector<1x1x8x8xf32>
    %37 = vector.shape_cast %36 : vector<1x1x8x8xf32> to vector<8x8xf32>
    %38 = vector.shape_cast %35 : vector<8x8xf32> to vector<1x1x8x8xf32>
    tpu.vector_store %arg6[%c0_32, %c2_33, %c0_34, %c0_35], %38 {strides = array<i32>} : memref<1x4x8x8xf32, #tpu.memory_space<vmem>>, vector<1x1x8x8xf32>,
    %39 = vector.extract_strided_slice %6 {offsets = [0, 80], sizes = [8, 8], strides = [1, 1]} : vector<8x96xf32> to vector<8x8xf32>
    %c0_36 = arith.constant 0 : index
    %c2_37 = arith.constant 2 : index
    %c0_38 = arith.constant 0 : index
    %c0_39 = arith.constant 0 : index
    %40 = vector.load %arg7[%c0_36, %c2_37, %c0_38, %c0_39] : memref<1x4x8x8xf32, #tpu.memory_space<vmem>>, vector<1x1x8x8xf32>
    %41 = vector.shape_cast %40 : vector<1x1x8x8xf32> to vector<8x8xf32>
    %42 = vector.shape_cast %39 : vector<8x8xf32> to vector<1x1x8x8xf32>
    tpu.vector_store %arg7[%c0_36, %c2_37, %c0_38, %c0_39], %42 {strides = array<i32>} : memref<1x4x8x8xf32, #tpu.memory_space<vmem>>, vector<1x1x8x8xf32>,
    %43 = vector.extract_strided_slice %6 {offsets = [0, 24], sizes = [8, 8], strides = [1, 1]} : vector<8x96xf32> to vector<8x8xf32>
    %c0_40 = arith.constant 0 : index
    %c3 = arith.constant 3 : index
    %c0_41 = arith.constant 0 : index
    %c0_42 = arith.constant 0 : index
    %44 = vector.load %arg5[%c0_40, %c3, %c0_41, %c0_42] : memref<1x4x8x8xf32, #tpu.memory_space<vmem>>, vector<1x1x8x8xf32>
    %45 = vector.shape_cast %44 : vector<1x1x8x8xf32> to vector<8x8xf32>
    %46 = vector.shape_cast %43 : vector<8x8xf32> to vector<1x1x8x8xf32>
    tpu.vector_store %arg5[%c0_40, %c3, %c0_41, %c0_42], %46 {strides = array<i32>} : memref<1x4x8x8xf32, #tpu.memory_space<vmem>>, vector<1x1x8x8xf32>,
    %47 = vector.extract_strided_slice %6 {offsets = [0, 56], sizes = [8, 8], strides = [1, 1]} : vector<8x96xf32> to vector<8x8xf32>
    %c0_43 = arith.constant 0 : index
    %c3_44 = arith.constant 3 : index
    %c0_45 = arith.constant 0 : index
    %c0_46 = arith.constant 0 : index
    %48 = vector.load %arg6[%c0_43, %c3_44, %c0_45, %c0_46] : memref<1x4x8x8xf32, #tpu.memory_space<vmem>>, vector<1x1x8x8xf32>
    %49 = vector.shape_cast %48 : vector<1x1x8x8xf32> to vector<8x8xf32>
    %50 = vector.shape_cast %47 : vector<8x8xf32> to vector<1x1x8x8xf32>
    tpu.vector_store %arg6[%c0_43, %c3_44, %c0_45, %c0_46], %50 {strides = array<i32>} : memref<1x4x8x8xf32, #tpu.memory_space<vmem>>, vector<1x1x8x8xf32>,
    %51 = vector.extract_strided_slice %6 {offsets = [0, 88], sizes = [8, 8], strides = [1, 1]} : vector<8x96xf32> to vector<8x8xf32>
    %c0_47 = arith.constant 0 : index
    %c3_48 = arith.constant 3 : index
    %c0_49 = arith.constant 0 : index
    %c0_50 = arith.constant 0 : index
    %52 = vector.load %arg7[%c0_47, %c3_48, %c0_49, %c0_50] : memref<1x4x8x8xf32, #tpu.memory_space<vmem>>, vector<1x1x8x8xf32>
    %53 = vector.shape_cast %52 : vector<1x1x8x8xf32> to vector<8x8xf32>
    %54 = vector.shape_cast %51 : vector<8x8xf32> to vector<1x1x8x8xf32>
    tpu.vector_store %arg7[%c0_47, %c3_48, %c0_49, %c0_50], %54 {strides = array<i32>} : memref<1x4x8x8xf32, #tpu.memory_space<vmem>>, vector<1x1x8x8xf32>,
    return
  }
  func.func @transform_0(%arg0: i32, %arg1: i32) -> (i32, i32, i32) {
    %c0_i32 = arith.constant 0 : i32
    %c0_i32_0 = arith.constant 0 : i32
    return %arg0, %arg1, %c0_i32 : i32, i32, i32
  }
  func.func @transform_1(%arg0: i32, %arg1: i32) -> (i32, i32) {
    %c0_i32 = arith.constant 0 : i32
    %c0_i32_0 = arith.constant 0 : i32
    %c0_i32_1 = arith.constant 0 : i32
    return %c0_i32, %c0_i32_0 : i32, i32
  }
  func.func @transform_2(%arg0: i32, %arg1: i32) -> (i32, i32) {
    %c0_i32 = arith.constant 0 : i32
    %c0_i32_0 = arith.constant 0 : i32
    %c0_i32_1 = arith.constant 0 : i32
    return %c0_i32, %c0_i32_0 : i32, i32
  }
  func.func @transform_3(%arg0: i32, %arg1: i32) -> (i32, i32, i32, i32) {
    %c0_i32 = arith.constant 0 : i32
    %c0_i32_0 = arith.constant 0 : i32
    %c0_i32_1 = arith.constant 0 : i32
    return %arg0, %c0_i32, %arg1, %c0_i32_0 : i32, i32, i32, i32
  }
  func.func @transform_4(%arg0: i32, %arg1: i32) -> (i32, i32, i32, i32) {
    %c0_i32 = arith.constant 0 : i32
    %c0_i32_0 = arith.constant 0 : i32
    %c0_i32_1 = arith.constant 0 : i32
    return %arg0, %c0_i32, %arg1, %c0_i32_0 : i32, i32, i32, i32
  }
  func.func @transform_5(%arg0: i32, %arg1: i32) -> (i32, i32, i32, i32) {
    %c0_i32 = arith.constant 0 : i32
    %c0_i32_0 = arith.constant 0 : i32
    %c0_i32_1 = arith.constant 0 : i32
    return %arg0, %c0_i32, %arg1, %c0_i32_0 : i32, i32, i32, i32
  }
}

</mosaic_0001>

<llo_original>
// kernel: tpu_custom_call.1
$region0: #{tpu_custom_call.1}
  #allocation0 [shape = 'u32[]', space=smem, size = 0x4, offset = 0x4, fixed_abs, tag = 'smem constant byte address 0x4 - core index']
  #allocation1 [shape = 'u32[144,128]{1,0:T(1,128)}', space=vmem, size = 0x12000, scoped, tag = 'internal scratch']
  %s0 = inlined_call_operand.hbm [shape: f32[2,8,32], index: 0, kind: input, shape index: {}]
  %s1 = inlined_call_operand.hbm [shape: f32[32,96], index: 1, kind: input, shape index: {}]
  %s2 = inlined_call_operand.vmem [shape: f32[1,96], index: 2, kind: input, shape index: {}]
  %s3 = inlined_call_operand.hbm [shape: f32[2,4,8,8], index: 3, kind: output, shape index: {0}]
  %s4 = inlined_call_operand.hbm [shape: f32[2,4,8,8], index: 4, kind: output, shape index: {1}]
  %s5 = inlined_call_operand.hbm [shape: f32[2,4,8,8], index: 5, kind: output, shape index: {2}]
  %6 = xla_tuple %s3, %s4, %s5
  %s7 = sld [smem:[#allocation0]]
  $region69: #{tpu_custom_call.1} parent=0
    _
  %s9 = ssub.s32 1, %s7
  %s10 = scalar_select 0, %s9, %s7
  $region1: #{tpu_custom_call.1} parent=0
    #allocation2 [shape = 'u8[8192]{0}', space=vmem, size = 0x2000, scoped, tag = 'input window, operand 0']
    #allocation3 [shape = 's32[2]{0}', space=sflag, size = 0x8, scoped, tag = 'scoped memory for tpu_custom_call.1']
    #allocation4 [shape = 's32[2]{0}', space=sflag, size = 0x8, scoped, tag = 'scoped memory for tpu_custom_call.1']
    #allocation5 [shape = 'u8[16384]{0}', space=vmem, size = 0x4000, scoped, tag = 'input window, operand 1, single buffered']
    #allocation6 [shape = 's32[1]{0}', space=sflag, size = 0x4, scoped, tag = 'scoped memory for tpu_custom_call.1']
    #allocation7 [shape = 'u8[32768]{0}', space=vmem, size = 0x8000, scoped, tag = 'output window, operand 0']
    #allocation8 [shape = 'u8[32768]{0}', space=vmem, size = 0x8000, scoped, tag = 'output window, operand 1']
    #allocation9 [shape = 's32[2]{0}', space=sflag, size = 0x8, scoped, tag = 'scoped memory for tpu_custom_call.1']
    #allocation10 [shape = 'u8[32768]{0}', space=vmem, size = 0x8000, scoped, tag = 'output window, operand 2']
    %11 = vsyncpa [#allocation3], 0
    %s12 = scalar_lea.sflag [#allocation3], 1
    %13 = vsyncpa %s12, 0
    %14 = vsyncpa [#allocation6], 0
    %15 = vsyncpa [#allocation4], 0
    %s16 = scalar_lea.sflag [#allocation4], 1
    %17 = vsyncpa %s16, 0
    %18 = vsyncpa [#allocation9], 0
    %s19 = scalar_lea.sflag [#allocation9], 1
    %20 = vsyncpa %s19, 0
    loop: start=0, step=1, limit=4
    $region2: #{tpu_custom_call.1} parent=1 // loop_pre_header
      _
    $region3: #{tpu_custom_call.1} parent=1 // loop_header
      %s22 = sphi 0, %s26
      %p23 = scmp.ge.s32.totalorder %s22, 4
      %s29 = sphi 0, %s41
      %s30 = sphi 0, %s37
      %s31 = sphi 0, %s29
      %s32 = sphi 0, %s30
      %s33 = sphi 0, %s31
      %s34 = sphi 0, %s32
      %s46 = sphi 0, %s48
      %s49 = sphi 0, %s46
      %s50 = sphi 0, %s49
      %s66 = sphi 0, %s50
      %s70 = sphi 0, %s70
      %s72 = sphi 0, %s70
      %s73 = sphi 0, %s72
      %s87 = sphi 0, %s73
      %s91 = sphi 0, %s91
      %s93 = sphi 0, %s91
      %s94 = sphi 0, %s93
      %s108 = sphi 0, %s94
      %s116 = sphi 0, %s118
      %s119 = sphi 0, %s116
      %s120 = sphi 0, %s119
      %s136 = sphi 0, %s120
      %s144 = sphi 0, %s146
      %s147 = sphi 0, %s144
      %s148 = sphi 0, %s147
      %s164 = sphi 0, %s148
      %s172 = sphi 0, %s174
      %s175 = sphi 0, %s172
      %s176 = sphi 0, %s175
      %s192 = sphi 0, %s176
    $region4: #{tpu_custom_call.1} parent=1 // loop_header_branch
      %25 = sbr.rel (%p23) target = $region8
    $region5: #{tpu_custom_call.1} parent=1 // loop_body
      %s27 = ssub.s32 %s22, 1
      %s28 = ssub.s32 %s22, 2
      %s35 = sadd.s32 1, %s30
      %p36 = scmp.ge.s32.totalorder %s35, 1
      %s37 = scalar_select %p36, 0, %s35
      %s38 = sadd.s32 1, %s29
      %s39 = scalar_select %p36, %s38, %s29
      %p40 = scmp.ge.s32.totalorder %s39, 2
      %s41 = scalar_select %p40, 0, %s39
      %s42 = ssub.s32 %s29, %s41
      %s43 = ssub.s32 %s30, %s37
      %s44 = sor.u32 %s42, %s43
      %p45 = scmp.eq.s32.totalorder %s44, 0
      %s47 = sadd.s32 %s46, 1
      %s48 = scalar_select %p45, %s46, %s47
      %p51 = pneg %p45
      %p52 = scmp.eq.s32.totalorder %s22, 1
      %p53 = por %p51, %p52
      %p54 = scmp.ne.s32.totalorder %s46, %s49
      %p55 = scmp.eq.s32.totalorder %s22, 0
      %p56 = por %p54, %p55
      %p57 = scmp.ne.s32.totalorder %s46, %s49
      %p58 = scmp.eq.s32.totalorder %s27, 1
      %p59 = por %p57, %p58
      %p60 = scmp.ne.s32.totalorder %s49, %s50
      %p61 = scmp.eq.s32.totalorder %s27, 0
      %p62 = por %p60, %p61
      %p63 = scmp.ne.s32.totalorder %s49, %s50
      %p64 = scmp.eq.s32.totalorder %s28, 1
      %p65 = por %p63, %p64
      %p67 = scmp.ne.s32.totalorder %s50, %s66
      %p68 = scmp.eq.s32.totalorder %s28, 0
      %p69 = por %p67, %p68
      %s71 = sadd.s32 %s70, 1
      %p74 = scmp.eq.s32.totalorder %s22, 1
      %p75 = scmp.ne.s32.totalorder %s70, %s72
      %p76 = scmp.eq.s32.totalorder %s22, 0
      %p77 = por %p75, %p76
      %p78 = scmp.ne.s32.totalorder %s70, %s72
      %p79 = scmp.eq.s32.totalorder %s27, 1
      %p80 = por %p78, %p79
      %p81 = scmp.ne.s32.totalorder %s72, %s73
      %p82 = scmp.eq.s32.totalorder %s27, 0
      %p83 = por %p81, %p82
      %p84 = scmp.ne.s32.totalorder %s72, %s73
      %p85 = scmp.eq.s32.totalorder %s28, 1
      %p86 = por %p84, %p85
      %p88 = scmp.ne.s32.totalorder %s73, %s87
      %p89 = scmp.eq.s32.totalorder %s28, 0
      %p90 = por %p88, %p89
      %s92 = sadd.s32 %s91, 1
      %p95 = scmp.eq.s32.totalorder %s22, 1
      %p96 = scmp.ne.s32.totalorder %s91, %s93
      %p97 = scmp.eq.s32.totalorder %s22, 0
      %p98 = por %p96, %p97
      %p99 = scmp.ne.s32.totalorder %s91, %s93
      %p100 = scmp.eq.s32.totalorder %s27, 1
      %p101 = por %p99, %p100
      %p102 = scmp.ne.s32.totalorder %s93, %s94
      %p103 = scmp.eq.s32.totalorder %s27, 0
      %p104 = por %p102, %p103
      %p105 = scmp.ne.s32.totalorder %s93, %s94
      %p106 = scmp.eq.s32.totalorder %s28, 1
      %p107 = por %p105, %p106
      %p109 = scmp.ne.s32.totalorder %s94, %s108
      %p110 = scmp.eq.s32.totalorder %s28, 0
      %p111 = por %p109, %p110
      %s112 = ssub.s32 %s29, %s41
      %s113 = ssub.s32 %s30, %s37
      %s114 = sor.u32 %s112, %s113
      %p115 = scmp.eq.s32.totalorder %s114, 0
      %s117 = sadd.s32 %s116, 1
      %s118 = scalar_select %p115, %s116, %s117
      %p121 = pneg %p115
      %p122 = scmp.eq.s32.totalorder %s22, 1
      %p123 = por %p121, %p122
      %p124 = scmp.ne.s32.totalorder %s116, %s119
      %p125 = scmp.eq.s32.totalorder %s22, 0
      %p126 = por %p124, %p125
      %p127 = scmp.ne.s32.totalorder %s116, %s119
      %p128 = scmp.eq.s32.totalorder %s27, 1
      %p129 = por %p127, %p128
      %p130 = scmp.ne.s32.totalorder %s119, %s120
      %p131 = scmp.eq.s32.totalorder %s27, 0
      %p132 = por %p130, %p131
      %p133 = scmp.ne.s32.totalorder %s119, %s120
      %p134 = scmp.eq.s32.totalorder %s28, 1
      %p135 = por %p133, %p134
      %p137 = scmp.ne.s32.totalorder %s120, %s136
      %p138 = scmp.eq.s32.totalorder %s28, 0
      %p139 = por %p137, %p138
      %s140 = ssub.s32 %s29, %s41
      %s141 = ssub.s32 %s30, %s37
      %s142 = sor.u32 %s140, %s141
      %p143 = scmp.eq.s32.totalorder %s142, 0
      %s145 = sadd.s32 %s144, 1
      %s146 = scalar_select %p143, %s144, %s145
      %p149 = pneg %p143
      %p150 = scmp.eq.s32.totalorder %s22, 1
      %p151 = por %p149, %p150
      %p152 = scmp.ne.s32.totalorder %s144, %s147
      %p153 = scmp.eq.s32.totalorder %s22, 0
      %p154 = por %p152, %p153
      %p155 = scmp.ne.s32.totalorder %s144, %s147
      %p156 = scmp.eq.s32.totalorder %s27, 1
      %p157 = por %p155, %p156
      %p158 = scmp.ne.s32.totalorder %s147, %s148
      %p159 = scmp.eq.s32.totalorder %s27, 0
      %p160 = por %p158, %p159
      %p161 = scmp.ne.s32.totalorder %s147, %s148
      %p162 = scmp.eq.s32.totalorder %s28, 1
      %p163 = por %p161, %p162
      %p165 = scmp.ne.s32.totalorder %s148, %s164
      %p166 = scmp.eq.s32.totalorder %s28, 0
      %p167 = por %p165, %p166
      %s168 = ssub.s32 %s29, %s41
      %s169 = ssub.s32 %s30, %s37
      %s170 = sor.u32 %s168, %s169
      %p171 = scmp.eq.s32.totalorder %s170, 0
      %s173 = sadd.s32 %s172, 1
      %s174 = scalar_select %p171, %s172, %s173
      %p177 = pneg %p171
      %p178 = scmp.eq.s32.totalorder %s22, 1
      %p179 = por %p177, %p178
      %p180 = scmp.ne.s32.totalorder %s172, %s175
      %p181 = scmp.eq.s32.totalorder %s22, 0
      %p182 = por %p180, %p181
      %p183 = scmp.ne.s32.totalorder %s172, %s175
      %p184 = scmp.eq.s32.totalorder %s27, 1
      %p185 = por %p183, %p184
      %p186 = scmp.ne.s32.totalorder %s175, %s176
      %p187 = scmp.eq.s32.totalorder %s27, 0
      %p188 = por %p186, %p187
      %p189 = scmp.ne.s32.totalorder %s175, %s176
      %p190 = scmp.eq.s32.totalorder %s28, 1
      %p191 = por %p189, %p190
      %p193 = scmp.ne.s32.totalorder %s176, %s192
      %p194 = scmp.eq.s32.totalorder %s28, 0
      %p195 = por %p193, %p194
      %p196 = scmp.le.s32.totalorder 1, %s22
      %p197 = scmp.lt.s32.totalorder %s22, 3
      %p198 = pnand %p196, %p197
      %p199 = pneg %p198
      // Predicated region
      $region9: #{tpu_custom_call.1} parent=5 // pred_check
        _
      $region10: #{tpu_custom_call.1} parent=5 // pred_check_branch
        %201 = sbr.rel (%p198) target = $region12
      $region11: #{tpu_custom_call.1} parent=5 // pred_region
        %s202 = ssub.s32 %s22, 1
        // Predicated region
        $region13: #{tpu_custom_call.1} parent=11 // pred_check
          %p203 = pneg %p83
        $region14: #{tpu_custom_call.1} parent=11 // pred_check_branch
          %205 = sbr.rel (%p203) target = $region16
        $region15: #{tpu_custom_call.1} parent=11 // pred_region
          %s207 = ssub.s32 512, 512
          %208 = vsyncadd [#allocation6], %s207
          %s209 = sshll.u32 [#allocation5], 4
          %s210 = int_to_ptr.vmem [resolvable:$true] %s209
          %215 = dma.hbm_to_vmem [thread:$0]  %s1, 512, %s210, [#allocation6], 128, 128, 8
        $region16: #{tpu_custom_call.1} parent=11 // pred_fallthru
          _
        // Predicated region
        $region17: #{tpu_custom_call.1} parent=11 // pred_check
          %p216 = pneg %p104
        $region18: #{tpu_custom_call.1} parent=11 // pred_check_branch
          %218 = sbr.rel (%p216) target = $region20
        $region19: #{tpu_custom_call.1} parent=11 // pred_region
          _
        $region20: #{tpu_custom_call.1} parent=11 // pred_fallthru
          _
      $region12: #{tpu_custom_call.1} parent=5 // pred_fallthru
        _
      %p219 = scmp.lt.s32.totalorder %s22, 2
      // Predicated region
      $region21: #{tpu_custom_call.1} parent=5 // pred_check
        %p220 = pneg %p219
      $region22: #{tpu_custom_call.1} parent=5 // pred_check_branch
        %222 = sbr.rel (%p220) target = $region24
      $region23: #{tpu_custom_call.1} parent=5 // pred_region
        // Predicated region
        $region25: #{tpu_custom_call.1} parent=23 // pred_check
          %p223 = pneg %p56
        $region26: #{tpu_custom_call.1} parent=23 // pred_check_branch
          %225 = sbr.rel (%p223) target = $region28
        $region27: #{tpu_custom_call.1} parent=23 // pred_region
          %s226 = sand.u32 %s46, 1
          %s227 = scalar_lea.sflag [#allocation3], %s226
          %s228 = sand.u32 %s46, 1
          %s229 = smul.addr %s228, 8
          %s230 = scalar_lea.vmem [#allocation2], %s229
          %s232 = ssub.s32 128, 128
          %233 = vsyncadd %s227, %s232
          %s234 = sadd.s32 %s30, %s29
          %s235 = smul.addr %s234, 128
          %s236 = scalar_lea.hbm %s0, %s235
          %s238 = sshll.u32 %s230, 4
          %s239 = int_to_ptr.vmem [resolvable:$true] %s238
          %241 = dma.hbm_to_vmem [thread:$0]  %s236, 128, %s239, %s227
        $region28: #{tpu_custom_call.1} parent=23 // pred_fallthru
          _
      $region24: #{tpu_custom_call.1} parent=5 // pred_fallthru
        _
      %p242 = scmp.le.s32.totalorder 1, %s22
      %p243 = scmp.lt.s32.totalorder %s22, 3
      %p244 = pnand %p242, %p243
      %p245 = pneg %p244
      // Predicated region
      $region29: #{tpu_custom_call.1} parent=5 // pred_check
        _
      $region30: #{tpu_custom_call.1} parent=5 // pred_check_branch
        %247 = sbr.rel (%p244) target = $region32
      $region31: #{tpu_custom_call.1} parent=5 // pred_region
        %s248 = ssub.s32 %s22, 1
        %s249 = sand.u32 %s49, 1
        %s250 = scalar_lea.sflag [#allocation3], %s249
        %s251 = sand.u32 %s49, 1
        %s252 = smul.addr %s251, 8
        %s253 = scalar_lea.vmem [#allocation2], %s252
        // Predicated region
        $region33: #{tpu_custom_call.1} parent=31 // pred_check
          %p254 = pneg %p62
        $region34: #{tpu_custom_call.1} parent=31 // pred_check_branch
          %256 = sbr.rel (%p254) target = $region36
        $region35: #{tpu_custom_call.1} parent=31 // pred_region
          %257 = dma.done %s250, 128
        $region36: #{tpu_custom_call.1} parent=31 // pred_fallthru
          _
        // Predicated region
        $region37: #{tpu_custom_call.1} parent=31 // pred_check
          %p258 = pneg %p83
        $region38: #{tpu_custom_call.1} parent=31 // pred_check_branch
          %260 = sbr.rel (%p258) target = $region40
        $region39: #{tpu_custom_call.1} parent=31 // pred_region
          %261 = dma.done [#allocation6], 512
        $region40: #{tpu_custom_call.1} parent=31 // pred_fallthru
          _
        %s262 = sand.u32 %s49, 1
        %s263 = scalar_lea.sflag [#allocation3], %s262
        %s264 = sand.u32 %s49, 1
        %s265 = smul.addr %s264, 8
        %s266 = scalar_lea.vmem [#allocation2], %s265
        %p267 = pneg %p62
        %p268 = pneg %p59
        %p269 = pneg %p83
        %p270 = pneg %p80
        %p271 = pneg %p104
        %p272 = pneg %p101
        %p273 = pneg %p132
        %p274 = pneg %p129
        %s275 = sand.u32 %s119, 1
        %s276 = scalar_lea.sflag [#allocation4], %s275
        %s277 = sand.u32 %s119, 1
        %s278 = smul.addr %s277, 32
        %s279 = scalar_lea.vmem [#allocation7], %s278
        %p280 = pneg %p160
        %p281 = pneg %p157
        %s282 = sand.u32 %s27, 1
        %s283 = scalar_lea.sflag [#allocation9], %s282
        %s284 = sand.u32 %s147, 1
        %s285 = smul.addr %s284, 32
        %s286 = scalar_lea.vmem [#allocation8], %s285
        %p287 = pneg %p188
        %p288 = pneg %p185
        %s289 = sand.u32 %s27, 1
        %s290 = scalar_lea.sflag [#allocation9], %s289
        %s291 = sand.u32 %s175, 1
        %s292 = smul.addr %s291, 32
        %s293 = scalar_lea.vmem [#allocation10], %s292
        %v294 = vld [vmem:[%s253] sm:$0xff]
        %v295 = vld [vmem:[#allocation5] sm:$0xff]
        %v296 = vld [vmem:[#allocation5 + $0x8] sm:$0xff]
        %v297 = vld [vmem:[#allocation5 + $0x10] sm:$0xff]
        %v298 = vld [vmem:[#allocation5 + $0x18] sm:$0xff]
        %v299 = vld [vmem:[%s2] sm:$0x1]
        %v301 = vlaneseq
        %v302 = vshrl.u32 %v301, 7
        %v303 = vsub.s32 0, %v302
        %v304 = vrot.slane %v299, %v303
        %vm306 = vcmask 261120
        %v308 = vsel %vm306, %v294, 0
        %310 = vmatprep.subr.mxu0 0.0
        %311 = vmatpush1.msra.mxu0 0.0
        %312 = vmatprep.subr.mxu0 0.0
        %313 = vmatpush1.msra.mxu0 0.0
        %314 = vmatprep.subr.mxu0 0.0
        %315 = vmatpush1.msra.mxu0 0.0
        %316 = vmatprep.subr.mxu0 0.0
        %317 = vmatpush1.msra.mxu0 0.0
        %318 = vmatprep.subr.mxu0 0.0
        %319 = vmatpush1.msra.mxu0 0.0
        %320 = vmatprep.subr.mxu0 0.0
        %321 = vmatpush1.msra.mxu0 0.0
        %322 = vmatprep.subr.mxu0 0.0
        %323 = vmatpush1.msra.mxu0 0.0
        %324 = vmatprep.subr.mxu0 0.0
        %325 = vmatpush1.msra.mxu0 0.0
        %326 = vmatprep.subr.mxu0 0.0
        %327 = vmatpush1.msra.mxu0 0.0
        %328 = vmatprep.subr.mxu0 0.0
        %329 = vmatpush1.msra.mxu0 0.0
        %330 = vmatprep.subr.mxu0 0.0
        %331 = vmatpush1.msra.mxu0 0.0
        %332 = vmatprep.subr.mxu0 0.0
        %333 = vmatpush1.msra.mxu0 0.0
        %334 = vmatprep.subr.mxu0 0.0
        %335 = vmatpush1.msra.mxu0 %v298
        %336 = vmatprep.subr.mxu0 0.0
        %337 = vmatpush1.msra.mxu0 %v297
        %338 = vmatprep.subr.mxu0 0.0
        %339 = vmatpush1.msra.mxu0 %v296
        %340 = vmatprep.subr.mxu0 0.0
        %341 = vmatpush1.msra.mxu0 %v295
        %342 = vmatprep.subr.mxu0 0.0
        %343 = vmatpush2.msra.mxu0 0.0
        %344 = vmatprep.subr.mxu0 0.0
        %345 = vmatpush2.msra.mxu0 0.0
        %346 = vmatprep.subr.mxu0 0.0
        %347 = vmatpush2.msra.mxu0 0.0
        %348 = vmatprep.subr.mxu0 0.0
        %349 = vmatpush2.msra.mxu0 0.0
        %350 = vmatprep.subr.mxu0 0.0
        %351 = vmatpush2.msra.mxu0 0.0
        %352 = vmatprep.subr.mxu0 0.0
        %353 = vmatpush2.msra.mxu0 0.0
        %354 = vmatprep.subr.mxu0 0.0
        %355 = vmatpush2.msra.mxu0 0.0
        %356 = vmatprep.subr.mxu0 0.0
        %357 = vmatpush2.msra.mxu0 0.0
        %358 = vmatprep.subr.mxu0 0.0
        %359 = vmatpush2.msra.mxu0 0.0
        %360 = vmatprep.subr.mxu0 0.0
        %361 = vmatpush2.msra.mxu0 0.0
        %362 = vmatprep.subr.mxu0 0.0
        %363 = vmatpush2.msra.mxu0 0.0
        %364 = vmatprep.subr.mxu0 0.0
        %365 = vmatpush2.msra.mxu0 0.0
        %366 = vmatprep.subr.mxu0 0.0
        %367 = vmatpush2.msra.mxu0 0.0
        %368 = vmatprep.subr.mxu0 0.0
        %369 = vmatpush2.msra.mxu0 0.0
        %370 = vmatprep.subr.mxu0 0.0
        %371 = vmatpush2.msra.mxu0 0.0
        %372 = vmatprep.subr.mxu0 0.0
        %373 = vmatpush2.msra.mxu0 0.0
        %374 = vmatprep.mubr.f32.mxu0 0.0
        %375 = vmatmul.mubr.f32.gmra.mxu0 %v308
        %v376 = vpop.f32.mrf.mxu0
        %v377 = vadd.f32 %v304, %v376
        %v378 = vpop.f32.mrf.mxu0
        %379 = vdwg.mxu0
        %vm380 = vcmask 64512
        %381 = vst.msk [vmem:[%s279] sm:$0xff] %vm380, %v377
        %383 = vrot.lane.b32.xlu0 %v377, 96
        %v384 = vpop.permute.xlu0 %383
        %386 = vst.msk [vmem:[%s286] sm:$0xff] %vm380, %v384
        %387 = vrot.lane.b32.xlu0 %v377, 64
        %v388 = vpop.permute.xlu0 %387
        %390 = vst.msk [vmem:[%s293] sm:$0xff] %vm380, %v388
        %391 = vrot.lane.b32.xlu0 %v377, 120
        %v392 = vpop.permute.xlu0 %391
        %s394 = scalar_lea.vmem %s279, 8 [#allocation7]
        %395 = vst.msk [vmem:[%s394] sm:$0xff] %vm380, %v392
        %396 = vrot.lane.b32.xlu0 %v377, 88
        %v397 = vpop.permute.xlu0 %396
        %s399 = scalar_lea.vmem %s286, 8 [#allocation8]
        %400 = vst.msk [vmem:[%s399] sm:$0xff] %vm380, %v397
        %401 = vrot.lane.b32.xlu0 %v377, 56
        %v402 = vpop.permute.xlu0 %401
        %s404 = scalar_lea.vmem %s293, 8 [#allocation10]
        %405 = vst.msk [vmem:[%s404] sm:$0xff] %vm380, %v402
        %406 = vrot.lane.b32.xlu0 %v377, 112
        %v407 = vpop.permute.xlu0 %406
        %s409 = scalar_lea.vmem %s279, 16 [#allocation7]
        %410 = vst.msk [vmem:[%s409] sm:$0xff] %vm380, %v407
        %411 = vrot.lane.b32.xlu0 %v377, 80
        %v412 = vpop.permute.xlu0 %411
        %s414 = scalar_lea.vmem %s286, 16 [#allocation8]
        %415 = vst.msk [vmem:[%s414] sm:$0xff] %vm380, %v412
        %416 = vrot.lane.b32.xlu0 %v377, 48
        %v417 = vpop.permute.xlu0 %416
        %s419 = scalar_lea.vmem %s293, 16 [#allocation10]
        %420 = vst.msk [vmem:[%s419] sm:$0xff] %vm380, %v417
        %421 = vrot.lane.b32.xlu0 %v377, 104
        %v422 = vpop.permute.xlu0 %421
        %s424 = scalar_lea.vmem %s279, 24 [#allocation7]
        %425 = vst.msk [vmem:[%s424] sm:$0xff] %vm380, %v422
        %426 = vrot.lane.b32.xlu0 %v377, 72
        %v427 = vpop.permute.xlu0 %426
        %s429 = scalar_lea.vmem %s286, 24 [#allocation8]
        %430 = vst.msk [vmem:[%s429] sm:$0xff] %vm380, %v427
        %431 = vrot.lane.b32.xlu0 %v377, 40
        %v432 = vpop.permute.xlu0 %431
        %s434 = scalar_lea.vmem %s293, 24 [#allocation10]
        %435 = vst.msk [vmem:[%s434] sm:$0xff] %vm380, %v432
        %s436 = sand.u32 %s119, 1
        %s437 = scalar_lea.sflag [#allocation4], %s436
        %s438 = sand.u32 %s119, 1
        %s439 = smul.addr %s438, 32
        %s440 = scalar_lea.vmem [#allocation7], %s439
        %s441 = sand.u32 %s27, 1
        %s442 = scalar_lea.sflag [#allocation9], %s441
        %s443 = sand.u32 %s147, 1
        %s444 = smul.addr %s443, 32
        %s445 = scalar_lea.vmem [#allocation8], %s444
        %s446 = sand.u32 %s27, 1
        %s447 = scalar_lea.sflag [#allocation9], %s446
        %s448 = sand.u32 %s175, 1
        %s449 = smul.addr %s448, 32
        %s450 = scalar_lea.vmem [#allocation10], %s449
        // Predicated region
        $region41: #{tpu_custom_call.1} parent=31 // pred_check
          %p451 = pneg %p129
        $region42: #{tpu_custom_call.1} parent=31 // pred_check_branch
          %453 = sbr.rel (%p451) target = $region44
        $region43: #{tpu_custom_call.1} parent=31 // pred_region
          %s455 = ssub.s32 512, 512
          %456 = vsyncadd %s437, %s455
          %s457 = smul.addr %s31, 4
          %s458 = sadd.s32 %s32, %s457
          %s459 = smul.addr %s458, 128
          %s460 = scalar_lea.hbm %s3, %s459
          %s461 = sshll.u32 %s440, 4
          %s462 = int_to_ptr.vmem [resolvable:$true] %s461
          %467 = dma.vmem_to_hbm [thread:$0]  %s462, 512, %s460, %s437, 128, 128, 8
        $region44: #{tpu_custom_call.1} parent=31 // pred_fallthru
          _
        // Predicated region
        $region45: #{tpu_custom_call.1} parent=31 // pred_check
          %p468 = pneg %p157
        $region46: #{tpu_custom_call.1} parent=31 // pred_check_branch
          %470 = sbr.rel (%p468) target = $region48
        $region47: #{tpu_custom_call.1} parent=31 // pred_region
          %s472 = ssub.s32 512, 512
          %473 = vsyncadd %s442, %s472
          %s474 = smul.addr %s31, 4
          %s475 = sadd.s32 %s32, %s474
          %s476 = smul.addr %s475, 128
          %s477 = scalar_lea.hbm %s4, %s476
          %s478 = sshll.u32 %s445, 4
          %s479 = int_to_ptr.vmem [resolvable:$true] %s478
          %484 = dma.vmem_to_hbm [thread:$0]  %s479, 512, %s477, %s442, 128, 128, 8
        $region48: #{tpu_custom_call.1} parent=31 // pred_fallthru
          _
        // Predicated region
        $region49: #{tpu_custom_call.1} parent=31 // pred_check
          %p485 = pneg %p185
        $region50: #{tpu_custom_call.1} parent=31 // pred_check_branch
          %487 = sbr.rel (%p485) target = $region52
        $region51: #{tpu_custom_call.1} parent=31 // pred_region
          %s489 = ssub.s32 512, 512
          %490 = vsyncadd %s447, %s489
          %s491 = smul.addr %s31, 4
          %s492 = sadd.s32 %s32, %s491
          %s493 = smul.addr %s492, 128
          %s494 = scalar_lea.hbm %s5, %s493
          %s495 = sshll.u32 %s450, 4
          %s496 = int_to_ptr.vmem [resolvable:$true] %s495
          %501 = dma.vmem_to_hbm [thread:$0]  %s496, 512, %s494, %s447, 128, 128, 8
        $region52: #{tpu_custom_call.1} parent=31 // pred_fallthru
          _
      $region32: #{tpu_custom_call.1} parent=5 // pred_fallthru
        _
      %p502 = scmp.le.s32.totalorder 2, %s22
      // Predicated region
      $region53: #{tpu_custom_call.1} parent=5 // pred_check
        %p503 = pneg %p502
      $region54: #{tpu_custom_call.1} parent=5 // pred_check_branch
        %505 = sbr.rel (%p503) target = $region56
      $region55: #{tpu_custom_call.1} parent=5 // pred_region
        %s506 = ssub.s32 %s22, 2
        // Predicated region
        $region57: #{tpu_custom_call.1} parent=55 // pred_check
          %p507 = pneg %p135
        $region58: #{tpu_custom_call.1} parent=55 // pred_check_branch
          %509 = sbr.rel (%p507) target = $region60
        $region59: #{tpu_custom_call.1} parent=55 // pred_region
          %s510 = sand.u32 %s120, 1
          %s511 = scalar_lea.sflag [#allocation4], %s510
          %s512 = sand.u32 %s120, 1
          %s513 = smul.addr %s512, 32
          %s514 = scalar_lea.vmem [#allocation7], %s513
          %515 = dma.done %s511, 512
        $region60: #{tpu_custom_call.1} parent=55 // pred_fallthru
          _
        // Predicated region
        $region61: #{tpu_custom_call.1} parent=55 // pred_check
          %p516 = pneg %p163
        $region62: #{tpu_custom_call.1} parent=55 // pred_check_branch
          %518 = sbr.rel (%p516) target = $region64
        $region63: #{tpu_custom_call.1} parent=55 // pred_region
          %s519 = sand.u32 %s28, 1
          %s520 = scalar_lea.sflag [#allocation9], %s519
          %s521 = sand.u32 %s148, 1
          %s522 = smul.addr %s521, 32
          %s523 = scalar_lea.vmem [#allocation8], %s522
          %524 = dma.done %s520, 512
        $region64: #{tpu_custom_call.1} parent=55 // pred_fallthru
          _
        // Predicated region
        $region65: #{tpu_custom_call.1} parent=55 // pred_check
          %p525 = pneg %p191
        $region66: #{tpu_custom_call.1} parent=55 // pred_check_branch
          %527 = sbr.rel (%p525) target = $region68
        $region67: #{tpu_custom_call.1} parent=55 // pred_region
          %s528 = sand.u32 %s28, 1
          %s529 = scalar_lea.sflag [#allocation9], %s528
          %s530 = sand.u32 %s176, 1
          %s531 = smul.addr %s530, 32
          %s532 = scalar_lea.vmem [#allocation10], %s531
          %533 = dma.done %s529, 512
        $region68: #{tpu_custom_call.1} parent=55 // pred_fallthru
          _
      $region56: #{tpu_custom_call.1} parent=5 // pred_fallthru
        _
    $region6: #{tpu_custom_call.1} parent=1 // loop_footer
      %s26 = sadd.s32 1, %s22
    $region7: #{tpu_custom_call.1} parent=1 // loop_footer_branch
      %21 = sbr.rel target = $region3
    $region8: #{tpu_custom_call.1} parent=1 // loop_exit
      _
    %534 = vsyncpa [#allocation3], 1
    %s535 = scalar_lea.sflag [#allocation3], 1
    %536 = vsyncpa %s535, 1
    %537 = vsyncpa [#allocation6], 1
    %538 = vsyncpa [#allocation4], 1
    %s539 = scalar_lea.sflag [#allocation4], 1
    %540 = vsyncpa %s539, 1
    %541 = vsyncpa [#allocation9], 1
    %s542 = scalar_lea.sflag [#allocation9], 1
    %543 = vsyncpa %s542, 1

</llo_original>
